<compile_context>
chip_gen: v5e
topology: v5e:2x2
jax: 0.10.0
libtpu: 0.0.40
codegen_flags: <defaults>
</compile_context>

<pallas_src>
import jax
import jax.numpy as jnp
from jax.experimental import pallas as pl
from jax.experimental.pallas import tpu as pltpu  # noqa: F401  (TPU backend)

LANE = 128


def _round_up(x, m):
    return ((x + m - 1) // m) * m


# ----------------------------- Pallas kernel --------------------------------

def _fused_forward_kernel(x_ref, w_ref, b_ref, m_ref, o_ref):
    # One MXU pass for the whole forward:
    #   y = x @ w_fused + bias_row
    # ReLU is applied only where the precomputed lane mask is 1 (the model_0
    # column band); the model_1 band keeps the raw affine output.  The epilogue
    # is a handful of VPU ops fully hidden under MXU/DMA latency.
    y = jnp.dot(x_ref[...], w_ref[...], preferred_element_type=jnp.float32)
    y = y + b_ref[...]                       # (1, Np) broadcast — one vadd
    relu_band = m_ref[...] > 0.5             # precomputed {0,1} lane mask
    o_ref[...] = jnp.where(relu_band, jnp.maximum(y, 0.0), y).astype(o_ref.dtype)


def fused_linear_forward(x, w_fused, bias_fused, relu_mask):
    """All submodel applications in one pallas_call (single full-array block)."""
    M, K = x.shape
    K2, Np = w_fused.shape
    assert K == K2
    assert bias_fused.shape == (1, Np) and relu_mask.shape == (1, Np)
    # Full-array blocks: no (8, 128) divisibility requirement, no wrapper-side
    # row padding needed (and therefore no dtype-dependent sublane constant).
    return pl.pallas_call(
        _fused_forward_kernel,
        out_shape=jax.ShapeDtypeStruct((M, Np), x.dtype),
        in_specs=[
            pl.BlockSpec((M, K), lambda: (0, 0)),
            pl.BlockSpec((K, Np), lambda: (0, 0)),
            pl.BlockSpec((1, Np), lambda: (0, 0)),
            pl.BlockSpec((1, Np), lambda: (0, 0)),
        ],
        out_specs=pl.BlockSpec((M, Np), lambda: (0, 0)),
    )(x, w_fused, bias_fused, relu_mask)


# ------------------------- synthetic submodels ------------------------------

class Model0:
    """Synthetic submodel: Linear(K->N) + ReLU on every tensor leaf of a nest."""

    def __init__(self, w, b):
        self.w, self.b = w, b


class Model1:
    """Synthetic submodel: plain Linear(K->N)."""

    def __init__(self, w, b):
        self.w, self.b = w, b


# ------------------------------- Main module --------------------------------

class Main:
    def __init__(self, model_0, model_1):
        self.model_0 = model_0
        self.model_1 = model_1
        self.dictionary = {'apple': 0, 'orange': 1, 'pear': 2}

        K, N0 = model_0.w.shape
        K1, N1 = model_1.w.shape
        assert K == K1, "submodels must share the input feature width to fuse"
        n_pad = _round_up(max(N0 + N1, LANE), LANE)   # lane-dense output width

        # Fused weight: model_0 columns [0, N0), model_1 columns [N0, N0+N1).
        w_fused = jnp.zeros((K, n_pad), jnp.float32)
        w_fused = w_fused.at[:, :N0].set(model_0.w)
        w_fused = w_fused.at[:, N0:N0 + N1].set(model_1.w)

        # Lane-dense fused bias row (added in-kernel — no K+1 bias fold).
        bias_fused = jnp.zeros((1, n_pad), jnp.float32)
        bias_fused = bias_fused.at[0, :N0].set(model_0.b)
        bias_fused = bias_fused.at[0, N0:N0 + N1].set(model_1.b)

        # Precomputed {0,1} ReLU column-band mask (model_0 band only).
        relu_mask = jnp.zeros((1, n_pad), jnp.float32)
        relu_mask = relu_mask.at[0, :N0].set(1.0)

        self.w_fused = w_fused
        self.bias_fused = bias_fused
        self.relu_mask = relu_mask
        self.K, self.N0, self.N1 = K, N0, N1

        # One jit'd graph for the whole forward => one dispatch.  Parameters are
        # explicit arguments (not closure constants): one resident HBM buffer
        # each, executable stable across retraces.
        self._jit_forward = jax.jit(self._fused_forward)

    # ------------------------------ glue ------------------------------------
    def preprocess(self, arg):
        return [
            {'a': {'b': self.dictionary[arg[0]['a']['b']]},
             'c': self.dictionary[arg[0]['c']]},
            jnp.array([self.dictionary[x] for x in arg[1]]),
        ]

    def postprocess(self, arg):
        total = [arg[0]['a']['b'].sum(), arg[0]['c'].sum(), arg[1].sum()]
        s = sum(total)
        return {'score': s, 'decision': s > 0}

    # ----------------------------- forward -----------------------------------
    def _fused_forward(self, w_fused, bias_fused, relu_mask, leaves0, x1):
        # Stack every model_0 leaf and the model_1 input along the batch axis
        # (one concat), run one Pallas matmul+epilogue, then slice the
        # lane-dense result back per leaf / per column band.
        rows = [x.shape[0] for x in leaves0] + [x1.shape[0]]
        x_all = jnp.concatenate(list(leaves0) + [x1], axis=0)

        y = fused_linear_forward(x_all, w_fused, bias_fused, relu_mask)

        outs0, off = [], 0
        for m in rows[:-1]:
            outs0.append(y[off:off + m, :self.N0])            # model_0 band (ReLU'd)
            off += m
        y1 = y[off:off + rows[-1], self.N0:self.N0 + self.N1]  # model_1 band
        return tuple(outs0), y1

    def forward(self, args):
        # Same semantics as the PyTorch module: 2-tuple of submodel outputs,
        # with the nested-dict structure of args[0] preserved.
        leaves0, treedef0 = jax.tree_util.tree_flatten(args[0])
        outs0, y1 = self._jit_forward(self.w_fused, self.bias_fused,
                                      self.relu_mask, tuple(leaves0), args[1])
        return (jax.tree_util.tree_unflatten(treedef0, list(outs0)), y1)

    def __call__(self, args):
        return self.forward(args)


# ----------------------------------- main ------------------------------------

if __name__ == "__main__":
    batch, hidden = 2, 32

    key = jax.random.PRNGKey(0)
    k0, k1, k2, k3, k4, k5, k6 = jax.random.split(key, 7)

    # Deterministic synthetic parameters.
    w0 = jax.random.normal(k0, (hidden, hidden), jnp.float32) * 0.1
    b0 = jax.random.normal(k1, (hidden,), jnp.float32) * 0.1
    w1 = jax.random.normal(k2, (hidden, hidden), jnp.float32) * 0.1
    b1 = jax.random.normal(k3, (hidden,), jnp.float32) * 0.1

    model = Main(Model0(w0, b0), Model1(w1, b1))

    # Inputs: nested dict of tensors + a plain tensor, [batch, hidden] each.
    args = (
        {'a': {'b': jax.random.normal(k4, (batch, hidden), jnp.float32)},
         'c': jax.random.normal(k5, (batch, hidden), jnp.float32)},
        jax.random.normal(k6, (batch, hidden), jnp.float32),
    )

    out = model(args)
    out = jax.block_until_ready(out)

    # Sanity checks against a pure-JAX reference.
    ref0_b = jnp.maximum(args[0]['a']['b'] @ w0 + b0, 0.0)
    ref0_c = jnp.maximum(args[0]['c'] @ w0 + b0, 0.0)
    ref1 = args[1] @ w1 + b1
    assert out[0]['a']['b'].shape == (batch, hidden)
    assert out[0]['c'].shape == (batch, hidden)
    assert out[1].shape == (batch, hidden)
    assert jnp.allclose(out[0]['a']['b'], ref0_b, atol=1e-4)
    assert jnp.allclose(out[0]['c'], ref0_c, atol=1e-4)
    assert jnp.allclose(out[1], ref1, atol=1e-4)

    # Exercise postprocess (pure host-side glue).
    _ = model.postprocess(out)

    print("KERNEL_OK")
</pallas_src>

<mosaic_0001>
module attributes {stable_mosaic.version = 11 : i64} {
  func.func @_fused_forward_kernel(%arg0: memref<6x32xf32, #tpu.memory_space<vmem>>, %arg1: memref<32x128xf32, #tpu.memory_space<vmem>>, %arg2: memref<1x128xf32, #tpu.memory_space<vmem>>, %arg3: memref<1x128xf32, #tpu.memory_space<vmem>>, %arg4: memref<6x128xf32, #tpu.memory_space<vmem>>) attributes {dimension_semantics = [], scalar_prefetch = 0 : i64, scratch_operands = 0 : i64, tpu.core_type = #tpu.core_type<tc>} {
    %c0 = arith.constant 0 : index
    %c0_0 = arith.constant 0 : index
    %0 = vector.load %arg0[%c0, %c0_0] : memref<6x32xf32, #tpu.memory_space<vmem>>, vector<6x32xf32>
    %c0_1 = arith.constant 0 : index
    %c0_2 = arith.constant 0 : index
    %1 = vector.load %arg1[%c0_1, %c0_2] : memref<32x128xf32, #tpu.memory_space<vmem>>, vector<32x128xf32>
    %cst = arith.constant dense<0.000000e+00> : vector<6x128xf32>
    %2 = tpu.matmul %0, %1, %cst {dimension_numbers = #tpu.dot_dimension_numbers<[1], [0], [0], [1], [0, 0, 1, 1], [], []>} : vector<6x32xf32>, vector<32x128xf32>, vector<6x128xf32> -> vector<6x128xf32>
    %c0_3 = arith.constant 0 : index
    %c0_4 = arith.constant 0 : index
    %3 = vector.load %arg2[%c0_3, %c0_4] : memref<1x128xf32, #tpu.memory_space<vmem>>, vector<1x128xf32>
    %4 = vector.broadcast %3 : vector<1x128xf32> to vector<6x128xf32>
    %5 = arith.addf %2, %4 : vector<6x128xf32>
    %c0_5 = arith.constant 0 : index
    %c0_6 = arith.constant 0 : index
    %6 = vector.load %arg3[%c0_5, %c0_6] : memref<1x128xf32, #tpu.memory_space<vmem>>, vector<1x128xf32>
    %cst_7 = arith.constant 5.000000e-01 : f32
    %7 = vector.broadcast %cst_7 : f32 to vector<1x128xf32>
    %8 = arith.cmpf ogt, %6, %7 : vector<1x128xf32>
    %cst_8 = arith.constant 0.000000e+00 : f32
    %9 = vector.broadcast %cst_8 : f32 to vector<6x128xf32>
    %10 = arith.maximumf %5, %9 : vector<6x128xf32>
    %11 = vector.shape_cast %8 : vector<1x128xi1> to vector<1x128xi1>
    %12 = vector.broadcast %11 : vector<1x128xi1> to vector<6x128xi1>
    %13 = arith.select %12, %10, %5 : vector<6x128xi1>, vector<6x128xf32>
    %c0_9 = arith.constant 0 : index
    %c0_10 = arith.constant 0 : index
    %14 = vector.load %arg4[%c0_9, %c0_10] : memref<6x128xf32, #tpu.memory_space<vmem>>, vector<6x128xf32>
    tpu.vector_store %arg4[%c0_9, %c0_10], %13 {strides = array<i32>} : memref<6x128xf32, #tpu.memory_space<vmem>>, vector<6x128xf32>,
    return
  }
}

</mosaic_0001>

<llo_original>
// kernel: _fused_forward.1
$region0: #{_fused_forward.1}
  #allocation0 [shape = 'u32[]', space=smem, size = 0x4, offset = 0x4, fixed_abs, tag = 'smem constant byte address 0x4 - core index']
  #allocation1 [shape = 'u32[72,128]{1,0:T(1,128)}', space=vmem, size = 0x9000, scoped, tag = 'internal scratch']
  %s0 = inlined_call_operand.vmem [shape: f32[6,32], index: 0, kind: input, shape index: {}]
  %s1 = inlined_call_operand.hbm [shape: f32[32,128], index: 1, kind: input, shape index: {}]
  %s2 = inlined_call_operand.vmem [shape: f32[1,128], index: 2, kind: input, shape index: {}]
  %s3 = inlined_call_operand.vmem [shape: f32[1,128], index: 3, kind: input, shape index: {}]
  %s4 = inlined_call_operand.vmem [shape: f32[6,128], index: 4, kind: output, shape index: {}]
  %s5 = sld [smem:[#allocation0]]
  $region30: #{_fused_forward.1} parent=0
    _
  %s7 = ssub.s32 1, %s5
  %s8 = scalar_select 0, %s7, %s5
  $region1: #{_fused_forward.1} parent=0
    #allocation2 [shape = 'u8[16384]{0}', space=vmem, size = 0x4000, scoped, tag = 'input window, operand 1, single buffered']
    #allocation3 [shape = 's32[1]{0}', space=sflag, size = 0x4, scoped, tag = 'scoped memory for _fused_forward.1']
    %9 = vsyncpa [#allocation3], 0
    // Predicated region
    $region2: #{_fused_forward.1} parent=1 // pred_check
      _
    $region3: #{_fused_forward.1} parent=1 // pred_check_branch
      %11 = sbr.rel (0) target = $region5
    $region4: #{_fused_forward.1} parent=1 // pred_region
      _
    $region5: #{_fused_forward.1} parent=1 // pred_fallthru
      _
    // Predicated region
    $region6: #{_fused_forward.1} parent=1 // pred_check
      _
    $region7: #{_fused_forward.1} parent=1 // pred_check_branch
      %13 = sbr.rel (0) target = $region9
    $region8: #{_fused_forward.1} parent=1 // pred_region
      %15 = vsyncadd [#allocation3], 0
      %s16 = sshll.u32 %s1, 4
      %s17 = int_to_ptr.hbm [resolvable:$true] %s16
      %s18 = sshll.u32 [#allocation2], 4
      %s19 = int_to_ptr.vmem [resolvable:$true] %s18
      %24 = dma.hbm_to_vmem [thread:$0]  %s17, 512, %s19, [#allocation3], 128, 128, 8
    $region9: #{_fused_forward.1} parent=1 // pred_fallthru
      _
    // Predicated region
    $region10: #{_fused_forward.1} parent=1 // pred_check
      _
    $region11: #{_fused_forward.1} parent=1 // pred_check_branch
      %26 = sbr.rel (0) target = $region13
    $region12: #{_fused_forward.1} parent=1 // pred_region
      _
    $region13: #{_fused_forward.1} parent=1 // pred_fallthru
      _
    // Predicated region
    $region14: #{_fused_forward.1} parent=1 // pred_check
      _
    $region15: #{_fused_forward.1} parent=1 // pred_check_branch
      %28 = sbr.rel (0) target = $region17
    $region16: #{_fused_forward.1} parent=1 // pred_region
      _
    $region17: #{_fused_forward.1} parent=1 // pred_fallthru
      _
    // Predicated region
    $region18: #{_fused_forward.1} parent=1 // pred_check
      _
    $region19: #{_fused_forward.1} parent=1 // pred_check_branch
      %30 = sbr.rel (0) target = $region21
    $region20: #{_fused_forward.1} parent=1 // pred_region
      %32 = dma.done [#allocation3], 512
    $region21: #{_fused_forward.1} parent=1 // pred_fallthru
      _
    %v33 = vld [vmem:[%s0] sm:$0x3f]
    %v34 = vld [vmem:[#allocation2] sm:$0xff]
    %v35 = vld [vmem:[#allocation2 + $0x8] sm:$0xff]
    %v36 = vld [vmem:[#allocation2 + $0x10] sm:$0xff]
    %v37 = vld [vmem:[#allocation2 + $0x18] sm:$0xff]
    %v38 = vld [vmem:[%s2] sm:$0x1]
    %v40 = vperm.slane %v38, 0
    %vm42 = vcmask 261120
    %v44 = vsel %vm42, %v33, 0
    %46 = vmatpush.msra.mxu0 0.0
    %47 = vmatpush.msra.mxu0 0.0
    %48 = vmatpush.msra.mxu0 0.0
    %49 = vmatpush.msra.mxu0 0.0
    %50 = vmatpush.msra.mxu0 0.0
    %51 = vmatpush.msra.mxu0 0.0
    %52 = vmatpush.msra.mxu0 0.0
    %53 = vmatpush.msra.mxu0 0.0
    %54 = vmatpush.msra.mxu0 0.0
    %55 = vmatpush.msra.mxu0 0.0
    %56 = vmatpush.msra.mxu0 0.0
    %57 = vmatpush.msra.mxu0 0.0
    %58 = vmatpush.msra.mxu0 %v37
    %59 = vmatpush.msra.mxu0 %v36
    %60 = vmatpush.msra.mxu0 %v35
    %61 = vmatpush.msra.mxu0 %v34
    %62 = vmatmul.f32.gmra.mxu0 %v44
    %v63 = vpop.f32.mrf.mxu0
    %v64 = vadd.f32 %v40, %v63
    %65 = vdwg.mxu0
    %v66 = vld [vmem:[%s3] sm:$0x1]
    %vm67 = vcmp.gt.f32.partialorder %v66, 0.5
    %v68 = vmax.f32 %v64, 0.0
    %v69 = vsel %vm67, 1, 0
    %v70 = vperm.slane %v69, 0
    %vm71 = vcmp.eq.s32.totalorder %v70, 1
    %v72 = vsel %vm71, %v68, %v64
    %73 = vst [vmem:[%s4] sm:$0x3f] %v72
    // Predicated region
    $region22: #{_fused_forward.1} parent=1 // pred_check
      _
    $region23: #{_fused_forward.1} parent=1 // pred_check_branch
      %75 = sbr.rel (0) target = $region25
    $region24: #{_fused_forward.1} parent=1 // pred_region
      _
    $region25: #{_fused_forward.1} parent=1 // pred_fallthru
      _
    // Predicated region
    $region26: #{_fused_forward.1} parent=1 // pred_check
      _
    $region27: #{_fused_forward.1} parent=1 // pred_check_branch
      %77 = sbr.rel (0) target = $region29
    $region28: #{_fused_forward.1} parent=1 // pred_region
      _
    $region29: #{_fused_forward.1} parent=1 // pred_fallthru
      _
    %78 = vsyncpa [#allocation3], 1

</llo_original>
